<compile_context>
chip_gen: v7x
topology: tpu7x:2x2x1
jax: 0.10.0
libtpu: 0.0.40
codegen_flags: <defaults>
</compile_context>

<pallas_src>
import jax
import jax.numpy as jnp
from jax.experimental import pallas as pl
from jax.experimental.pallas import tpu as pltpu


# ------------------------------ pass 1: stats ------------------------------
def _stats_kernel(x_ref, sum_ref, ssq_ref):
    """Accumulate per-channel sum and sum-of-squares over spatial tiles.

    x_ref:   (1, C, T)  feature-map tile (channels on sublanes, spatial on lanes)
    sum_ref: (1, C, 1)  running per-channel sum    (resident across tiles)
    ssq_ref: (1, C, 1)  running per-channel sum-sq (resident across tiles)
    """
    @pl.when(pl.program_id(1) == 0)
    def _():
        sum_ref[...] = jnp.zeros_like(sum_ref)
        ssq_ref[...] = jnp.zeros_like(ssq_ref)

    x = x_ref[...].astype(jnp.float32)
    sum_ref[...] += jnp.sum(x, axis=-1, keepdims=True)
    ssq_ref[...] += jnp.sum(x * x, axis=-1, keepdims=True)


# ---------------------------- pass 2: normalize ----------------------------
def _norm_kernel(x_ref, scale_ref, shift_ref, o_ref):
    """y = x * scale[n, c] + shift[n, c].

    scale/shift already fold the mixed mean, 1/sqrt(var+eps), gamma and beta,
    so this pass is a single fused multiply-add per element (lane-dense).
    """
    x = x_ref[...].astype(jnp.float32)
    o_ref[...] = (x * scale_ref[...] + shift_ref[...]).astype(o_ref.dtype)


def _pick_spatial_tile(hw, c, dtype_bytes=4, max_tile_bytes=4 << 20):
    """Largest spatial tile T that is a multiple of 128, divides HW and keeps
    a (1, C, T) f32 tile under max_tile_bytes (so 2x double-buffered in + out
    tiles stay well inside the v7x 32 MiB scoped-VMEM default).  Falls back to
    the full spatial extent for small / non-128-aligned feature maps."""
    if hw % 128 != 0:
        return hw
    max_elems = max(128, max_tile_bytes // (dtype_bytes * max(c, 1)))
    t = min(hw, (max_elems // 128) * 128)
    while hw % t != 0:
        t -= 128
    return max(t, 128)


def switch_norm_2d(x_nchw, weight, bias, mean_weight, var_weight,
                   eps=1e-5, interpret=False):
    """SwitchNorm2d forward (training mode, using_bn=True)."""
    N, C, H, W = x_nchw.shape
    HW = H * W
    x = x_nchw.reshape(N, C, HW)          # zero-cost view of NCHW
    T = _pick_spatial_tile(HW, C)
    n_t = HW // T

    # ---- pass 1: per-(n, c) sum and sum-of-squares (Pallas, tiled) ----
    sums, ssqs = pl.pallas_call(
        _stats_kernel,
        out_shape=(jax.ShapeDtypeStruct((N, C, 1), jnp.float32),
                   jax.ShapeDtypeStruct((N, C, 1), jnp.float32)),
        grid=(N, n_t),
        in_specs=[pl.BlockSpec((1, C, T), lambda n, t: (n, 0, t))],
        out_specs=(pl.BlockSpec((1, C, 1), lambda n, t: (n, 0, 0)),
                   pl.BlockSpec((1, C, 1), lambda n, t: (n, 0, 0))),
        compiler_params=pltpu.CompilerParams(
            dimension_semantics=("parallel", "arbitrary")),
        interpret=interpret,
    )(x)

    # ---- glue: O(N*C) statistics mixing (IN / LN / BN) in plain JAX ----
    s = sums[..., 0]                                               # (N, C)
    ss = ssqs[..., 0]                                              # (N, C)
    cnt = jnp.float32(HW)
    mean_in = s / cnt                                              # (N, C)
    # PyTorch Tensor.var default is unbiased (divisor HW - 1).
    var_in = (ss - cnt * mean_in * mean_in) / (cnt - 1.0)          # (N, C)

    mean_ln = jnp.mean(mean_in, axis=1, keepdims=True)             # (N, 1)
    temp = var_in + mean_in * mean_in
    var_ln = jnp.mean(temp, axis=1, keepdims=True) - mean_ln ** 2  # (N, 1)

    # training-mode batch statistics (using_bn=True branch)
    mean_bn = jnp.mean(mean_in, axis=0, keepdims=True)             # (1, C)
    var_bn = jnp.mean(temp, axis=0, keepdims=True) - mean_bn ** 2  # (1, C)
    # TODO(synk): running_mean / running_var momentum buffer updates are a
    # stateful training side effect and do not affect the forward output.

    mw = jax.nn.softmax(mean_weight)
    vw = jax.nn.softmax(var_weight)
    mean = mw[0] * mean_in + mw[1] * mean_ln + mw[2] * mean_bn     # (N, C)
    var = vw[0] * var_in + vw[1] * var_ln + vw[2] * var_bn         # (N, C)

    gamma = weight.reshape(1, C)
    beta = bias.reshape(1, C)
    inv = jax.lax.rsqrt(var + eps)                                 # (N, C)
    scale = (gamma * inv).astype(jnp.float32)                      # (N, C)
    shift = (beta - mean * scale).astype(jnp.float32)              # (N, C)
    scale = scale[..., None]                                       # (N, C, 1)
    shift = shift[..., None]                                       # (N, C, 1)

    # ---- pass 2: lane-dense elementwise normalize (Pallas, tiled) ----
    y = pl.pallas_call(
        _norm_kernel,
        out_shape=jax.ShapeDtypeStruct((N, C, HW), x_nchw.dtype),
        grid=(N, n_t),
        in_specs=[pl.BlockSpec((1, C, T), lambda n, t: (n, 0, t)),
                  pl.BlockSpec((1, C, 1), lambda n, t: (n, 0, 0)),
                  pl.BlockSpec((1, C, 1), lambda n, t: (n, 0, 0))],
        out_specs=pl.BlockSpec((1, C, T), lambda n, t: (n, 0, t)),
        compiler_params=pltpu.CompilerParams(
            dimension_semantics=("parallel", "parallel")),
        interpret=interpret,
    )(x, scale, shift)

    return y.reshape(N, C, H, W)


# ----------------------------- pure-JAX reference -----------------------------
def _ref_switch_norm_2d(x, weight, bias, mean_weight, var_weight, eps=1e-5):
    N, C, H, W = x.shape
    xr = x.reshape(N, C, -1)
    mean_in = jnp.mean(xr, axis=-1, keepdims=True)                 # (N, C, 1)
    var_in = jnp.var(xr, axis=-1, keepdims=True, ddof=1)           # unbiased
    mean_ln = jnp.mean(mean_in, axis=1, keepdims=True)             # (N, 1, 1)
    temp = var_in + mean_in ** 2
    var_ln = jnp.mean(temp, axis=1, keepdims=True) - mean_ln ** 2  # (N, 1, 1)
    mean_bn = jnp.mean(mean_in, axis=0, keepdims=True)             # (1, C, 1)
    var_bn = jnp.mean(temp, axis=0, keepdims=True) - mean_bn ** 2  # (1, C, 1)
    mw = jax.nn.softmax(mean_weight)
    vw = jax.nn.softmax(var_weight)
    mean = mw[0] * mean_in + mw[1] * mean_ln + mw[2] * mean_bn
    var = vw[0] * var_in + vw[1] * var_ln + vw[2] * var_bn
    xn = (xr - mean) / jnp.sqrt(var + eps)
    xn = xn.reshape(N, C, H, W)
    return xn * weight + bias


# ------------------------------------ main ------------------------------------
if __name__ == "__main__":
    key = jax.random.PRNGKey(0)
    N, C, H, W = 2, 4, 16, 16
    kx, kw, kb, km, kv = jax.random.split(key, 5)

    x = jax.random.normal(kx, (N, C, H, W), dtype=jnp.float32)
    # Parameter shapes match the PyTorch module; values are perturbed from the
    # defaults so the softmax mixture and the affine are non-trivial.
    weight = 1.0 + 0.1 * jax.random.normal(kw, (1, C, 1, 1), jnp.float32)
    bias = 0.05 * jax.random.normal(kb, (1, C, 1, 1), jnp.float32)
    mean_weight = 1.0 + 0.5 * jax.random.normal(km, (3,), jnp.float32)
    var_weight = 1.0 + 0.5 * jax.random.normal(kv, (3,), jnp.float32)

    out = jax.block_until_ready(
        switch_norm_2d(x, weight, bias, mean_weight, var_weight))
    ref = jax.block_until_ready(
        _ref_switch_norm_2d(x, weight, bias, mean_weight, var_weight))

    assert out.shape == (N, C, H, W), out.shape
    max_err = float(jnp.max(jnp.abs(out - ref)))
    assert jnp.allclose(out, ref, atol=1e-4, rtol=1e-4), max_err

    print("KERNEL_OK")
</pallas_src>

<mosaic_0001>
module attributes {stable_mosaic.version = 11 : i64} {
  func.func @_stats_kernel(%arg0: i32, %arg1: i32, %arg2: memref<1x4x256xf32, #tpu.memory_space<vmem>>, %arg3: memref<1x4x1xf32, #tpu.memory_space<vmem>>, %arg4: memref<1x4x1xf32, #tpu.memory_space<vmem>>) attributes {dimension_semantics = [#tpu.dimension_semantics<parallel>, #tpu.dimension_semantics<arbitrary>], iteration_bounds = array<i64: 2, 1>, scalar_prefetch = 0 : i64, scratch_operands = 0 : i64, tpu.core_type = #tpu.core_type<tc>, window_params = [{transform_indices = @transform_0, window_bounds = array<i64: 1, 4, 256>}, {transform_indices = @transform_1, window_bounds = array<i64: 1, 4, 1>}, {transform_indices = @transform_2, window_bounds = array<i64: 1, 4, 1>}]} {
    %c0_i32 = arith.constant 0 : i32
    %0 = arith.cmpi eq, %arg1, %c0_i32 : i32
    %1 = arith.extui %0 : i1 to i32
    %c0_i32_0 = arith.constant 0 : i32
    %2 = arith.cmpi ne, %1, %c0_i32_0 : i32
    scf.if %2 {
      %cst_16 = arith.constant 0.000000e+00 : f32
      %15 = vector.broadcast %cst_16 : f32 to vector<1x4x1xf32>
      %c0_17 = arith.constant 0 : index
      %c0_18 = arith.constant 0 : index
      %c0_19 = arith.constant 0 : index
      %16 = vector.load %arg3[%c0_17, %c0_18, %c0_19] : memref<1x4x1xf32, #tpu.memory_space<vmem>>, vector<1x4x1xf32>
      tpu.vector_store %arg3[%c0_17, %c0_18, %c0_19], %15 {strides = array<i32>} : memref<1x4x1xf32, #tpu.memory_space<vmem>>, vector<1x4x1xf32>,
      %cst_20 = arith.constant 0.000000e+00 : f32
      %17 = vector.broadcast %cst_20 : f32 to vector<1x4x1xf32>
      %c0_21 = arith.constant 0 : index
      %c0_22 = arith.constant 0 : index
      %c0_23 = arith.constant 0 : index
      %18 = vector.load %arg4[%c0_21, %c0_22, %c0_23] : memref<1x4x1xf32, #tpu.memory_space<vmem>>, vector<1x4x1xf32>
      tpu.vector_store %arg4[%c0_21, %c0_22, %c0_23], %17 {strides = array<i32>} : memref<1x4x1xf32, #tpu.memory_space<vmem>>, vector<1x4x1xf32>,
    } else {
    }
    %c0 = arith.constant 0 : index
    %c0_1 = arith.constant 0 : index
    %c0_2 = arith.constant 0 : index
    %3 = vector.load %arg2[%c0, %c0_1, %c0_2] : memref<1x4x256xf32, #tpu.memory_space<vmem>>, vector<1x4x256xf32>
    %c0_3 = arith.constant 0 : index
    %c0_4 = arith.constant 0 : index
    %c0_5 = arith.constant 0 : index
    %4 = vector.load %arg3[%c0_3, %c0_4, %c0_5] : memref<1x4x1xf32, #tpu.memory_space<vmem>>, vector<1x4x1xf32>
    %cst = arith.constant dense<0.000000e+00> : vector<1x4xf32>
    %5 = vector.multi_reduction <add>, %3, %cst [2] : vector<1x4x256xf32> to vector<1x4xf32>
    %6 = vector.shape_cast %5 : vector<1x4xf32> to vector<1x4x1xf32>
    %7 = arith.addf %4, %6 : vector<1x4x1xf32>
    %c0_6 = arith.constant 0 : index
    %c0_7 = arith.constant 0 : index
    %c0_8 = arith.constant 0 : index
    %8 = vector.load %arg3[%c0_6, %c0_7, %c0_8] : memref<1x4x1xf32, #tpu.memory_space<vmem>>, vector<1x4x1xf32>
    tpu.vector_store %arg3[%c0_6, %c0_7, %c0_8], %7 {strides = array<i32>} : memref<1x4x1xf32, #tpu.memory_space<vmem>>, vector<1x4x1xf32>,
    %c0_9 = arith.constant 0 : index
    %c0_10 = arith.constant 0 : index
    %c0_11 = arith.constant 0 : index
    %9 = vector.load %arg4[%c0_9, %c0_10, %c0_11] : memref<1x4x1xf32, #tpu.memory_space<vmem>>, vector<1x4x1xf32>
    %10 = arith.mulf %3, %3 : vector<1x4x256xf32>
    %cst_12 = arith.constant dense<0.000000e+00> : vector<1x4xf32>
    %11 = vector.multi_reduction <add>, %10, %cst_12 [2] : vector<1x4x256xf32> to vector<1x4xf32>
    %12 = vector.shape_cast %11 : vector<1x4xf32> to vector<1x4x1xf32>
    %13 = arith.addf %9, %12 : vector<1x4x1xf32>
    %c0_13 = arith.constant 0 : index
    %c0_14 = arith.constant 0 : index
    %c0_15 = arith.constant 0 : index
    %14 = vector.load %arg4[%c0_13, %c0_14, %c0_15] : memref<1x4x1xf32, #tpu.memory_space<vmem>>, vector<1x4x1xf32>
    tpu.vector_store %arg4[%c0_13, %c0_14, %c0_15], %13 {strides = array<i32>} : memref<1x4x1xf32, #tpu.memory_space<vmem>>, vector<1x4x1xf32>,
    return
  }
  func.func @transform_0(%arg0: i32, %arg1: i32) -> (i32, i32, i32) {
    %c0_i32 = arith.constant 0 : i32
    %c0_i32_0 = arith.constant 0 : i32
    return %arg0, %c0_i32, %arg1 : i32, i32, i32
  }
  func.func @transform_1(%arg0: i32, %arg1: i32) -> (i32, i32, i32) {
    %c0_i32 = arith.constant 0 : i32
    %c0_i32_0 = arith.constant 0 : i32
    %c0_i32_1 = arith.constant 0 : i32
    return %arg0, %c0_i32, %c0_i32_0 : i32, i32, i32
  }
  func.func @transform_2(%arg0: i32, %arg1: i32) -> (i32, i32, i32) {
    %c0_i32 = arith.constant 0 : i32
    %c0_i32_0 = arith.constant 0 : i32
    %c0_i32_1 = arith.constant 0 : i32
    return %arg0, %c0_i32, %c0_i32_0 : i32, i32, i32
  }
}

</mosaic_0001>

<llo_original>
// kernel: tpu_custom_call.1
$region0: #{tpu_custom_call.1}
  #allocation0 [shape = 'u32[]', space=smem, size = 0x4, offset = 0x4, fixed_abs, tag = 'smem constant byte address 0x4 - core index']
  #allocation1 [shape = 'u32[144,128]{1,0:T(1,128)}', space=vmem, size = 0x12000, scoped, tag = 'internal scratch']
  %s0 = inlined_call_operand.hbm [shape: f32[2,4,256], index: 0, kind: input, shape index: {}]
  %s1 = inlined_call_operand.vmem [shape: f32[2,4,1], index: 1, kind: output, shape index: {0}]
  %s2 = inlined_call_operand.vmem [shape: f32[2,4,1], index: 2, kind: output, shape index: {1}]
  %3 = xla_tuple %s1, %s2
  %s4 = sld [smem:[#allocation0]]
  $region53: #{tpu_custom_call.1} parent=0
    _
  %s6 = ssub.s32 1, %s4
  %s7 = scalar_select 0, %s6, %s4
  $region1: #{tpu_custom_call.1} parent=0
    #allocation2 [shape = 'u8[8192]{0}', space=vmem, size = 0x2000, scoped, tag = 'input window, operand 0']
    #allocation3 [shape = 's32[2]{0}', space=sflag, size = 0x8, scoped, tag = 'scoped memory for tpu_custom_call.1']
    %8 = vsyncpa [#allocation3], 0
    %s9 = scalar_lea.sflag [#allocation3], 1
    %10 = vsyncpa %s9, 0
    loop: start=0, step=1, limit=4
    $region2: #{tpu_custom_call.1} parent=1 // loop_pre_header
      _
    $region3: #{tpu_custom_call.1} parent=1 // loop_header
      %s12 = sphi 0, %s16
      %p13 = scmp.ge.s32.totalorder %s12, 4
      %s19 = sphi 0, %s31
      %s20 = sphi 0, %s27
      %s21 = sphi 0, %s19
      %s22 = sphi 0, %s20
      %s23 = sphi 0, %s21
      %s24 = sphi 0, %s22
      %s36 = sphi 0, %s38
      %s39 = sphi 0, %s36
      %s40 = sphi 0, %s39
      %s56 = sphi 0, %s40
      %s62 = sphi 0, %s64
      %s65 = sphi 0, %s62
      %s66 = sphi 0, %s65
      %s82 = sphi 0, %s66
      %s88 = sphi 0, %s90
      %s91 = sphi 0, %s88
      %s92 = sphi 0, %s91
      %s108 = sphi 0, %s92
    $region4: #{tpu_custom_call.1} parent=1 // loop_header_branch
      %15 = sbr.rel (%p13) target = $region8
    $region5: #{tpu_custom_call.1} parent=1 // loop_body
      %s17 = ssub.s32 %s12, 1
      %s18 = ssub.s32 %s12, 2
      %s25 = sadd.s32 1, %s20
      %p26 = scmp.ge.s32.totalorder %s25, 1
      %s27 = scalar_select %p26, 0, %s25
      %s28 = sadd.s32 1, %s19
      %s29 = scalar_select %p26, %s28, %s19
      %p30 = scmp.ge.s32.totalorder %s29, 2
      %s31 = scalar_select %p30, 0, %s29
      %s32 = ssub.s32 %s19, %s31
      %s33 = ssub.s32 %s20, %s27
      %s34 = sor.u32 %s32, %s33
      %p35 = scmp.eq.s32.totalorder %s34, 0
      %s37 = sadd.s32 %s36, 1
      %s38 = scalar_select %p35, %s36, %s37
      %p41 = pneg %p35
      %p42 = scmp.eq.s32.totalorder %s12, 1
      %p43 = por %p41, %p42
      %p44 = scmp.ne.s32.totalorder %s36, %s39
      %p45 = scmp.eq.s32.totalorder %s12, 0
      %p46 = por %p44, %p45
      %p47 = scmp.ne.s32.totalorder %s36, %s39
      %p48 = scmp.eq.s32.totalorder %s17, 1
      %p49 = por %p47, %p48
      %p50 = scmp.ne.s32.totalorder %s39, %s40
      %p51 = scmp.eq.s32.totalorder %s17, 0
      %p52 = por %p50, %p51
      %p53 = scmp.ne.s32.totalorder %s39, %s40
      %p54 = scmp.eq.s32.totalorder %s18, 1
      %p55 = por %p53, %p54
      %p57 = scmp.ne.s32.totalorder %s40, %s56
      %p58 = scmp.eq.s32.totalorder %s18, 0
      %p59 = por %p57, %p58
      %s60 = ssub.s32 %s19, %s31
      %p61 = scmp.eq.s32.totalorder %s60, 0
      %s63 = sadd.s32 %s62, 1
      %s64 = scalar_select %p61, %s62, %s63
      %p67 = pneg %p61
      %p68 = scmp.eq.s32.totalorder %s12, 1
      %p69 = por %p67, %p68
      %p70 = scmp.ne.s32.totalorder %s62, %s65
      %p71 = scmp.eq.s32.totalorder %s12, 0
      %p72 = por %p70, %p71
      %p73 = scmp.ne.s32.totalorder %s62, %s65
      %p74 = scmp.eq.s32.totalorder %s17, 1
      %p75 = por %p73, %p74
      %p76 = scmp.ne.s32.totalorder %s65, %s66
      %p77 = scmp.eq.s32.totalorder %s17, 0
      %p78 = por %p76, %p77
      %p79 = scmp.ne.s32.totalorder %s65, %s66
      %p80 = scmp.eq.s32.totalorder %s18, 1
      %p81 = por %p79, %p80
      %p83 = scmp.ne.s32.totalorder %s66, %s82
      %p84 = scmp.eq.s32.totalorder %s18, 0
      %p85 = por %p83, %p84
      %s86 = ssub.s32 %s19, %s31
      %p87 = scmp.eq.s32.totalorder %s86, 0
      %s89 = sadd.s32 %s88, 1
      %s90 = scalar_select %p87, %s88, %s89
      %p93 = pneg %p87
      %p94 = scmp.eq.s32.totalorder %s12, 1
      %p95 = por %p93, %p94
      %p96 = scmp.ne.s32.totalorder %s88, %s91
      %p97 = scmp.eq.s32.totalorder %s12, 0
      %p98 = por %p96, %p97
      %p99 = scmp.ne.s32.totalorder %s88, %s91
      %p100 = scmp.eq.s32.totalorder %s17, 1
      %p101 = por %p99, %p100
      %p102 = scmp.ne.s32.totalorder %s91, %s92
      %p103 = scmp.eq.s32.totalorder %s17, 0
      %p104 = por %p102, %p103
      %p105 = scmp.ne.s32.totalorder %s91, %s92
      %p106 = scmp.eq.s32.totalorder %s18, 1
      %p107 = por %p105, %p106
      %p109 = scmp.ne.s32.totalorder %s92, %s108
      %p110 = scmp.eq.s32.totalorder %s18, 0
      %p111 = por %p109, %p110
      %p112 = scmp.le.s32.totalorder 1, %s12
      %p113 = scmp.lt.s32.totalorder %s12, 3
      %p114 = pnand %p112, %p113
      %p115 = pneg %p114
      // Predicated region
      $region9: #{tpu_custom_call.1} parent=5 // pred_check
        _
      $region10: #{tpu_custom_call.1} parent=5 // pred_check_branch
        %117 = sbr.rel (%p114) target = $region12
      $region11: #{tpu_custom_call.1} parent=5 // pred_region
        %s118 = ssub.s32 %s12, 1
      $region12: #{tpu_custom_call.1} parent=5 // pred_fallthru
        _
      %p119 = scmp.lt.s32.totalorder %s12, 2
      // Predicated region
      $region13: #{tpu_custom_call.1} parent=5 // pred_check
        %p120 = pneg %p119
      $region14: #{tpu_custom_call.1} parent=5 // pred_check_branch
        %122 = sbr.rel (%p120) target = $region16
      $region15: #{tpu_custom_call.1} parent=5 // pred_region
        // Predicated region
        $region17: #{tpu_custom_call.1} parent=15 // pred_check
          %p123 = pneg %p46
        $region18: #{tpu_custom_call.1} parent=15 // pred_check_branch
          %125 = sbr.rel (%p123) target = $region20
        $region19: #{tpu_custom_call.1} parent=15 // pred_region
          %s126 = sand.u32 %s36, 1
          %s127 = scalar_lea.sflag [#allocation3], %s126
          %s128 = sand.u32 %s36, 1
          %s129 = smul.addr %s128, 8
          %s130 = scalar_lea.vmem [#allocation2], %s129
          %s131 = smul.u32 2, %s20
          %s133 = ssub.s32 128, 128
          %134 = vsyncadd %s127, %s133
          %s135 = smul.addr %s19, 2
          %s136 = sadd.s32 %s131, %s135
          %s137 = smul.addr %s136, 64
          %s138 = scalar_lea.hbm %s0, %s137
          %s140 = sshll.u32 %s130, 4
          %s141 = int_to_ptr.vmem [resolvable:$true] %s140
          %143 = dma.hbm_to_vmem [thread:$0]  %s138, 128, %s141, %s127
        $region20: #{tpu_custom_call.1} parent=15 // pred_fallthru
          _
      $region16: #{tpu_custom_call.1} parent=5 // pred_fallthru
        _
      %p144 = scmp.le.s32.totalorder 1, %s12
      %p145 = scmp.lt.s32.totalorder %s12, 3
      %p146 = pnand %p144, %p145
      %p147 = pneg %p146
      // Predicated region
      $region21: #{tpu_custom_call.1} parent=5 // pred_check
        _
      $region22: #{tpu_custom_call.1} parent=5 // pred_check_branch
        %149 = sbr.rel (%p146) target = $region24
      $region23: #{tpu_custom_call.1} parent=5 // pred_region
        %s150 = ssub.s32 %s12, 1
        %s151 = sand.u32 %s39, 1
        %s152 = scalar_lea.sflag [#allocation3], %s151
        %s153 = sand.u32 %s39, 1
        %s154 = smul.addr %s153, 8
        %s155 = scalar_lea.vmem [#allocation2], %s154
        // Predicated region
        $region25: #{tpu_custom_call.1} parent=23 // pred_check
          %p156 = pneg %p52
        $region26: #{tpu_custom_call.1} parent=23 // pred_check_branch
          %158 = sbr.rel (%p156) target = $region28
        $region27: #{tpu_custom_call.1} parent=23 // pred_region
          %159 = dma.done %s152, 128
        $region28: #{tpu_custom_call.1} parent=23 // pred_fallthru
          _
        %s160 = sand.u32 %s39, 1
        %s161 = scalar_lea.sflag [#allocation3], %s160
        %s162 = sand.u32 %s39, 1
        %s163 = smul.addr %s162, 8
        %s164 = scalar_lea.vmem [#allocation2], %s163
        %p165 = pneg %p52
        %p166 = pneg %p49
        %p167 = pneg %p78
        %p168 = pneg %p75
        %p169 = scmp.lt.s32.totalorder %s21, 1
        %s170 = scalar_select %p169, %s21, 1
        %s171 = smul.addr %s170, 4
        %s172 = scalar_lea.vmem %s1, %s171
        %p173 = pneg %p104
        %p174 = pneg %p101
        %p175 = scmp.lt.s32.totalorder %s21, 1
        %s176 = scalar_select %p175, %s21, 1
        %s177 = smul.addr %s176, 4
        %s178 = scalar_lea.vmem %s2, %s177
        %s179 = smul.u32 2, %s22
        %p180 = scmp.lt.s32.totalorder %s21, 1
        %s181 = scalar_select %p180, %s21, 1
        %s182 = smul.addr %s181, 4
        %s183 = scalar_lea.vmem %s1, %s182
        %p184 = scmp.lt.s32.totalorder %s21, 1
        %s185 = scalar_select %p184, %s21, 1
        %s186 = smul.addr %s185, 4
        %s187 = scalar_lea.vmem %s2, %s186
        %p188 = scmp.eq.s32.totalorder %s22, 0
        // Predicated region
        $region29: #{tpu_custom_call.1} parent=23 // pred_check
          %p189 = pneg %p188
        $region30: #{tpu_custom_call.1} parent=23 // pred_check_branch
          %191 = sbr.rel (%p189) target = $region32
        $region31: #{tpu_custom_call.1} parent=23 // pred_region
          %vm192 = vcmask 3072
          %193 = vst.msk [vmem:[%s183] sm:$0xf] %vm192, 0.0
          %194 = vst.msk [vmem:[%s187] sm:$0xf] %vm192, 0.0
        $region32: #{tpu_custom_call.1} parent=23 // pred_fallthru
          _
        %v195 = vld [vmem:[%s155] sm:$0xff]
        %v196 = vld [vmem:[%s183] sm:$0xf]
        %v198 = vcombine.high %v195, %v195
        %vm200 = vcmask 1043456
        %v201 = vsel %vm200, %v195, 0.0
        %v202 = vsel %vm200, %v198, 0.0
        %v203 = vadd.f32 %v201, %v202
        %204 = vadd.xlane.f32.xlu0 %v203
        %v205 = vpop.xlane.xlu0 %204
        %v206 = vadd.f32 %v196, %v205
        %vm207 = vcmask 3072
        %208 = vst.msk [vmem:[%s183] sm:$0xf] %vm207, %v206
        %v209 = vld [vmem:[%s187] sm:$0xf]
        %v210 = vmul.f32 %v195, %v195
        %v212 = vcombine.high %v210, %v210
        %v214 = vsel %vm200, %v210, 0.0
        %v215 = vsel %vm200, %v212, 0.0
        %v216 = vadd.f32 %v214, %v215
        %217 = vadd.xlane.f32.xlu0 %v216
        %v218 = vpop.xlane.xlu0 %217
        %v219 = vadd.f32 %v209, %v218
        %220 = vst.msk [vmem:[%s187] sm:$0xf] %vm207, %v219
        %p221 = scmp.lt.s32.totalorder %s21, 1
        %s222 = scalar_select %p221, %s21, 1
        %s223 = smul.addr %s222, 4
        %s224 = scalar_lea.vmem %s1, %s223
        %p225 = scmp.lt.s32.totalorder %s21, 1
        %s226 = scalar_select %p225, %s21, 1
        %s227 = smul.addr %s226, 4
        %s228 = scalar_lea.vmem %s2, %s227
        // Predicated region
        $region33: #{tpu_custom_call.1} parent=23 // pred_check
          %p229 = pneg %p75
        $region34: #{tpu_custom_call.1} parent=23 // pred_check_branch
          %231 = sbr.rel (%p229) target = $region36
        $region35: #{tpu_custom_call.1} parent=23 // pred_region
          _
        $region36: #{tpu_custom_call.1} parent=23 // pred_fallthru
          _
        // Predicated region
        $region37: #{tpu_custom_call.1} parent=23 // pred_check
          %p232 = pneg %p101
        $region38: #{tpu_custom_call.1} parent=23 // pred_check_branch
          %234 = sbr.rel (%p232) target = $region40
        $region39: #{tpu_custom_call.1} parent=23 // pred_region
          _
        $region40: #{tpu_custom_call.1} parent=23 // pred_fallthru
          _
      $region24: #{tpu_custom_call.1} parent=5 // pred_fallthru
        _
      %p235 = scmp.le.s32.totalorder 2, %s12
      // Predicated region
      $region41: #{tpu_custom_call.1} parent=5 // pred_check
        %p236 = pneg %p235
      $region42: #{tpu_custom_call.1} parent=5 // pred_check_branch
        %238 = sbr.rel (%p236) target = $region44
      $region43: #{tpu_custom_call.1} parent=5 // pred_region
        %s239 = ssub.s32 %s12, 2
        // Predicated region
        $region45: #{tpu_custom_call.1} parent=43 // pred_check
          %p240 = pneg %p81
        $region46: #{tpu_custom_call.1} parent=43 // pred_check_branch
          %242 = sbr.rel (%p240) target = $region48
        $region47: #{tpu_custom_call.1} parent=43 // pred_region
          %p243 = scmp.lt.s32.totalorder %s23, 1
          %s244 = scalar_select %p243, %s23, 1
          %s245 = smul.addr %s244, 4
          %s246 = scalar_lea.vmem %s1, %s245
        $region48: #{tpu_custom_call.1} parent=43 // pred_fallthru
          _
        // Predicated region
        $region49: #{tpu_custom_call.1} parent=43 // pred_check
          %p247 = pneg %p107
        $region50: #{tpu_custom_call.1} parent=43 // pred_check_branch
          %249 = sbr.rel (%p247) target = $region52
        $region51: #{tpu_custom_call.1} parent=43 // pred_region
          %p250 = scmp.lt.s32.totalorder %s23, 1
          %s251 = scalar_select %p250, %s23, 1
          %s252 = smul.addr %s251, 4
          %s253 = scalar_lea.vmem %s2, %s252
        $region52: #{tpu_custom_call.1} parent=43 // pred_fallthru
          _
      $region44: #{tpu_custom_call.1} parent=5 // pred_fallthru
        _
    $region6: #{tpu_custom_call.1} parent=1 // loop_footer
      %s16 = sadd.s32 1, %s12
    $region7: #{tpu_custom_call.1} parent=1 // loop_footer_branch
      %11 = sbr.rel target = $region3
    $region8: #{tpu_custom_call.1} parent=1 // loop_exit
      _
    %254 = vsyncpa [#allocation3], 1
    %s255 = scalar_lea.sflag [#allocation3], 1
    %256 = vsyncpa %s255, 1

</llo_original>
